<compile_context>
chip_gen: v6e
topology: v6e:2x2x1
jax: 0.10.0
libtpu: 0.0.40
codegen_flags: <defaults>
</compile_context>

<pallas_src>
import jax
import jax.numpy as jnp
from jax import lax
from jax.experimental import pallas as pl
from jax.experimental.pallas import tpu as pltpu

_LANES = 128
_SUBLANES = 8
_MAX_TILE_ROWS = 8192      # 8192 x 128 f32 = 4 MiB per input per grid step
_CHUNK_ROWS = 256          # in-kernel chunk: bounds live vregs (no tile-sized spill)
_ACC_CANDIDATES = (64, 32, 16, 8)


def _num_tensorcores() -> int:
    """Best-effort TensorCore count of the local device (for megacore sharding)."""
    try:
        kind = jax.devices()[0].device_kind.lower()
    except Exception:
        return 1
    if "lite" in kind or "v5e" in kind or "v6" in kind:
        return 1
    if "v7" in kind or "7x" in kind or "v4" in kind or "v5p" in kind:
        return 2
    return 1


def _make_psnr_kernel(tile_rows: int, chunk_rows: int, acc_rows: int,
                      rows: int, steps_per_core: int, needs_mask: bool):
    """Sum-of-squared-differences kernel.

    acc_ref is this core's (acc_rows, 128) output block; it stays resident in
    VMEM across the sequential second grid axis and is written back once.
    """
    n_chunks = tile_rows // chunk_rows
    folds = chunk_rows // acc_rows

    def kernel(o_ref, t_ref, acc_ref):
        c = pl.program_id(0)
        j = pl.program_id(1)

        @pl.when(j == 0)
        def _init():
            acc_ref[...] = jnp.zeros_like(acc_ref)

        tile_start = (c * steps_per_core + j) * tile_rows

        def add_chunk(i, masked):
            start = i * chunk_rows
            if not isinstance(start, int):
                start = pl.multiple_of(start, chunk_rows)
            o_c = o_ref[pl.ds(start, chunk_rows), :].astype(jnp.float32)
            t_c = t_ref[pl.ds(start, chunk_rows), :].astype(jnp.float32)
            d = o_c - t_c
            sq = d * d
            if masked:
                # Zero rows past the real slab (garbage from partial / clamped
                # duplicate edge blocks). Wrapper zero-padding already gives 0.
                row_ids = (tile_start + start) + lax.broadcasted_iota(
                    jnp.int32, (chunk_rows, _LANES), 0)
                sq = jnp.where(row_ids < rows, sq, 0.0)
            if folds > 1:
                # Pure sublane-group vreg adds (VALU); no cross-lane work.
                sq = sq.reshape(folds, acc_rows, _LANES).sum(axis=0)
            acc_ref[...] += sq

        def accumulate(masked):
            if n_chunks == 1:
                add_chunk(0, masked)
            else:
                def body(i, carry):
                    add_chunk(i, masked)
                    return carry
                lax.fori_loop(0, n_chunks, body, 0)

        if needs_mask:
            # Covers both the genuine partial tail (tile straddles `rows`) and
            # the clamped duplicate block (tile_start >= rows).
            is_tail = tile_start + tile_rows > rows

            @pl.when(jnp.logical_not(is_tail))
            def _fast():
                accumulate(masked=False)

            @pl.when(is_tail)
            def _tail():
                accumulate(masked=True)
        else:
            accumulate(masked=False)

    return kernel


def psnr(output: jax.Array, target: jax.Array) -> jax.Array:
    assert output.shape == target.shape, "output/target shapes must match"
    n_elems = int(output.size)

    o_flat = output.reshape(-1)
    t_flat = target.reshape(-1)

    # dtype-aware pad unit so rows land on the native sublane packing
    # (8 rows for 32-bit, 16 for 16-bit, 32 for 8-bit) -> no relayout work.
    def _packing(dt):
        return max(_SUBLANES, 32 // max(1, jnp.dtype(dt).itemsize))

    unit = _LANES * max(_packing(output.dtype), _packing(target.dtype))
    pad = (-n_elems) % unit
    if pad:
        o_flat = jnp.pad(o_flat, (0, pad))
        t_flat = jnp.pad(t_flat, (0, pad))
    rows = (n_elems + pad) // _LANES
    o2d = o_flat.reshape(rows, _LANES)
    t2d = t_flat.reshape(rows, _LANES)

    # Tile sizing: big lane-dense tiles, always a multiple of the in-kernel
    # chunk so the fori_loop divides the tile exactly.
    if rows >= _CHUNK_ROWS:
        tile_rows = min(_MAX_TILE_ROWS, (rows // _CHUNK_ROWS) * _CHUNK_ROWS)
    else:
        tile_rows = rows                      # small case: single chunk
    chunk_rows = min(_CHUNK_ROWS, tile_rows)
    acc_rows = _SUBLANES
    for cand in _ACC_CANDIDATES:
        if chunk_rows % cand == 0:
            acc_rows = cand
            break

    total_steps = -(-rows // tile_rows)
    ncores = min(_num_tensorcores(), total_steps)
    steps_per_core = -(-total_steps // ncores)
    covered_rows = ncores * steps_per_core * tile_rows
    needs_mask = covered_rows != rows

    if ncores * steps_per_core == total_steps:
        def in_map(c, j):
            return (c * steps_per_core + j, 0)
    else:
        # At most one (core, step) pair falls past the last real block: clamp
        # its DMA to a valid block; the kernel masks its contribution to zero.
        def in_map(c, j):
            return (jnp.minimum(c * steps_per_core + j, total_steps - 1), 0)

    itemsize_o = jnp.dtype(output.dtype).itemsize
    itemsize_t = jnp.dtype(target.dtype).itemsize
    # Double-buffered input footprint + headroom for output blocks / scratch.
    tile_in_bytes = tile_rows * _LANES * (itemsize_o + itemsize_t)
    vmem_limit = int(2 * tile_in_bytes + (8 << 20))

    cost = pl.CostEstimate(
        flops=3 * n_elems,
        transcendentals=0,
        bytes_accessed=n_elems * (itemsize_o + itemsize_t)
        + ncores * acc_rows * _LANES * 4,
    )

    partials = pl.pallas_call(
        _make_psnr_kernel(tile_rows, chunk_rows, acc_rows, rows,
                          steps_per_core, needs_mask),
        out_shape=jax.ShapeDtypeStruct((ncores, acc_rows, _LANES), jnp.float32),
        grid_spec=pl.GridSpec(
            grid=(ncores, steps_per_core),
            in_specs=[
                pl.BlockSpec((tile_rows, _LANES), in_map),
                pl.BlockSpec((tile_rows, _LANES), in_map),
            ],
            # Per-core partial-sum block; squeezed leading dim -> kernel sees
            # (acc_rows, 128), resident across the reduction axis j.
            out_specs=pl.BlockSpec((None, acc_rows, _LANES), lambda c, j: (c, 0, 0)),
        ),
        compiler_params=pltpu.CompilerParams(
            dimension_semantics=("parallel", "arbitrary"),
            vmem_limit_bytes=vmem_limit,
        ),
        cost_estimate=cost,
    )(o2d, t2d)

    # Tiny final combine in plain JAX (scalar work).
    ssd = jnp.sum(partials)
    mse = ssd / jnp.float32(n_elems)
    # 10 * log10(1/mse); mse == 0 -> +inf, matching torch. Peak signal = 1.0 per spec.
    return 10.0 * jnp.log10(1.0 / mse)


def psnr_ref(output, target):
    mse = jnp.mean((output.astype(jnp.float32) - target.astype(jnp.float32)) ** 2)
    return 10.0 * jnp.log10(1.0 / mse)


if __name__ == "__main__":
    key = jax.random.PRNGKey(0)
    k1, k2 = jax.random.split(key)

    # NCHW, small shapes consistent with an image-metric forward pass.
    out = jax.random.uniform(k1, (2, 4, 16, 16), dtype=jnp.float32)
    tgt = jax.random.uniform(k2, (2, 4, 16, 16), dtype=jnp.float32)
    result = psnr(out, tgt)
    jax.block_until_ready(result)
    expected = psnr_ref(out, tgt)
    assert jnp.allclose(result, expected, rtol=1e-4, atol=1e-4), (result, expected)

    # Ragged element count (exercises the minimal zero-pad path, acc_rows=8).
    k3, k4 = jax.random.split(k1)
    out2 = jax.random.uniform(k3, (3, 3, 30, 10), dtype=jnp.float32)
    tgt2 = jax.random.uniform(k4, (3, 3, 30, 10), dtype=jnp.float32)
    r2 = psnr(out2, tgt2)
    jax.block_until_ready(r2)
    assert jnp.allclose(r2, psnr_ref(out2, tgt2), rtol=1e-4, atol=1e-4)

    # Multi-step case: big tiles, chunked inner loop, gated tail mask
    # (and the clamped duplicate block / core split when 2 TensorCores).
    k5, k6 = jax.random.split(k2)
    out3 = jax.random.uniform(k5, (1, 4, 400, 400), dtype=jnp.float32)
    tgt3 = jax.random.uniform(k6, (1, 4, 400, 400), dtype=jnp.float32)
    r3 = psnr(out3, tgt3)
    jax.block_until_ready(r3)
    assert jnp.allclose(r3, psnr_ref(out3, tgt3), rtol=1e-4, atol=1e-4)

    # Half-precision inputs stream at native width (16-row packing unit).
    out4 = out.astype(jnp.bfloat16)
    tgt4 = tgt.astype(jnp.bfloat16)
    r4 = psnr(out4, tgt4)
    jax.block_until_ready(r4)
    assert jnp.allclose(r4, psnr_ref(out4, tgt4), rtol=1e-3, atol=1e-3)

    print("KERNEL_OK")
</pallas_src>

<mosaic_0001>
module attributes {stable_mosaic.version = 11 : i64} {
  func.func @kernel(%arg0: i32, %arg1: i32, %arg2: memref<16x128xf32, #tpu.memory_space<vmem>>, %arg3: memref<16x128xf32, #tpu.memory_space<vmem>>, %arg4: memref<1x16x128xf32, #tpu.memory_space<vmem>>) attributes {dimension_semantics = [#tpu.dimension_semantics<parallel>, #tpu.dimension_semantics<arbitrary>], iteration_bounds = array<i64: 1, 1>, scalar_prefetch = 0 : i64, scratch_operands = 0 : i64, tpu.core_type = #tpu.core_type<tc>, window_params = [{transform_indices = @transform_0, window_bounds = array<i64: 16, 128>}, {transform_indices = @transform_1, window_bounds = array<i64: 16, 128>}, {transform_indices = @transform_2, window_bounds = array<i64: 1, 16, 128>}]} {
    %c0_i32 = arith.constant 0 : i32
    %0 = arith.cmpi eq, %arg1, %c0_i32 : i32
    %1 = arith.extui %0 : i1 to i32
    %c0_i32_0 = arith.constant 0 : i32
    %2 = arith.cmpi ne, %1, %c0_i32_0 : i32
    scf.if %2 {
      %cst = arith.constant 0.000000e+00 : f32
      %13 = vector.broadcast %cst : f32 to vector<16x128xf32>
      %c0_10 = arith.constant 0 : index
      %c0_11 = arith.constant 0 : index
      %c0_12 = arith.constant 0 : index
      %14 = vector.load %arg4[%c0_10, %c0_11, %c0_12] : memref<1x16x128xf32, #tpu.memory_space<vmem>>, vector<1x16x128xf32>
      %15 = vector.shape_cast %14 : vector<1x16x128xf32> to vector<16x128xf32>
      %16 = vector.shape_cast %13 : vector<16x128xf32> to vector<1x16x128xf32>
      tpu.vector_store %arg4[%c0_10, %c0_11, %c0_12], %16 {strides = array<i32>} : memref<1x16x128xf32, #tpu.memory_space<vmem>>, vector<1x16x128xf32>,
    } else {
    }
    %c0 = arith.constant 0 : index
    %c0_1 = arith.constant 0 : index
    %3 = vector.load %arg2[%c0, %c0_1] : memref<16x128xf32, #tpu.memory_space<vmem>>, vector<16x128xf32>
    %c0_2 = arith.constant 0 : index
    %c0_3 = arith.constant 0 : index
    %4 = vector.load %arg3[%c0_2, %c0_3] : memref<16x128xf32, #tpu.memory_space<vmem>>, vector<16x128xf32>
    %5 = arith.subf %3, %4 : vector<16x128xf32>
    %6 = arith.mulf %5, %5 : vector<16x128xf32>
    %c0_4 = arith.constant 0 : index
    %c0_5 = arith.constant 0 : index
    %c0_6 = arith.constant 0 : index
    %7 = vector.load %arg4[%c0_4, %c0_5, %c0_6] : memref<1x16x128xf32, #tpu.memory_space<vmem>>, vector<1x16x128xf32>
    %8 = vector.shape_cast %7 : vector<1x16x128xf32> to vector<16x128xf32>
    %9 = arith.addf %8, %6 : vector<16x128xf32>
    %c0_7 = arith.constant 0 : index
    %c0_8 = arith.constant 0 : index
    %c0_9 = arith.constant 0 : index
    %10 = vector.load %arg4[%c0_7, %c0_8, %c0_9] : memref<1x16x128xf32, #tpu.memory_space<vmem>>, vector<1x16x128xf32>
    %11 = vector.shape_cast %10 : vector<1x16x128xf32> to vector<16x128xf32>
    %12 = vector.shape_cast %9 : vector<16x128xf32> to vector<1x16x128xf32>
    tpu.vector_store %arg4[%c0_7, %c0_8, %c0_9], %12 {strides = array<i32>} : memref<1x16x128xf32, #tpu.memory_space<vmem>>, vector<1x16x128xf32>,
    return
  }
  func.func @transform_0(%arg0: i32, %arg1: i32) -> (i32, i32) {
    %c1_i32 = arith.constant 1 : i32
    %0 = arith.muli %arg0, %c1_i32 : i32
    %1 = arith.addi %0, %arg1 : i32
    %c0_i32 = arith.constant 0 : i32
    %c0_i32_0 = arith.constant 0 : i32
    return %1, %c0_i32 : i32, i32
  }
  func.func @transform_1(%arg0: i32, %arg1: i32) -> (i32, i32) {
    %c1_i32 = arith.constant 1 : i32
    %0 = arith.muli %arg0, %c1_i32 : i32
    %1 = arith.addi %0, %arg1 : i32
    %c0_i32 = arith.constant 0 : i32
    %c0_i32_0 = arith.constant 0 : i32
    return %1, %c0_i32 : i32, i32
  }
  func.func @transform_2(%arg0: i32, %arg1: i32) -> (i32, i32, i32) {
    %c0_i32 = arith.constant 0 : i32
    %c0_i32_0 = arith.constant 0 : i32
    %c0_i32_1 = arith.constant 0 : i32
    return %arg0, %c0_i32, %c0_i32_0 : i32, i32, i32
  }
}

</mosaic_0001>

<llo_original>
// kernel: tpu_custom_call.1
$region0: #{tpu_custom_call.1}
  #allocation0 [shape = 'u32[]', space=smem, size = 0x4, offset = 0x4, fixed_abs, tag = 'smem constant byte address 0x4 - core index']
  #allocation1 [shape = 'u32[144,128]{1,0:T(1,128)}', space=vmem, size = 0x12000, scoped, tag = 'internal scratch']
  %s0 = inlined_call_operand.hbm [shape: f32[16,128], index: 0, kind: input, shape index: {}]
  %s1 = inlined_call_operand.hbm [shape: f32[16,128], index: 1, kind: input, shape index: {}]
  %s2 = inlined_call_operand.hbm [shape: f32[1,16,128], index: 2, kind: output, shape index: {}]
  %s3 = sld [smem:[#allocation0]]
  $region30: #{tpu_custom_call.1} parent=0
    _
  %s5 = ssub.s32 1, %s3
  %s6 = scalar_select 0, %s5, %s3
  $region1: #{tpu_custom_call.1} parent=0
    #allocation2 [shape = 'u8[8192]{0}', space=vmem, size = 0x2000, scoped, tag = 'input window, operand 0, single buffered']
    #allocation3 [shape = 's32[1]{0}', space=sflag, size = 0x4, scoped, tag = 'scoped memory for tpu_custom_call.1']
    #allocation4 [shape = 's32[1]{0}', space=sflag, size = 0x4, scoped, tag = 'scoped memory for tpu_custom_call.1']
    #allocation5 [shape = 'u8[8192]{0}', space=vmem, size = 0x2000, scoped, tag = 'input window, operand 1, single buffered']
    #allocation6 [shape = 's32[1]{0}', space=sflag, size = 0x4, scoped, tag = 'scoped memory for tpu_custom_call.1']
    #allocation7 [shape = 'u8[8192]{0}', space=vmem, size = 0x2000, scoped, tag = 'output window, operand 0, single buffered']
    %7 = vsyncpa [#allocation3], 0
    %8 = vsyncpa [#allocation6], 0
    %9 = vsyncpa [#allocation4], 0
    // Predicated region
    $region2: #{tpu_custom_call.1} parent=1 // pred_check
      _
    $region3: #{tpu_custom_call.1} parent=1 // pred_check_branch
      %11 = sbr.rel (0) target = $region5
    $region4: #{tpu_custom_call.1} parent=1 // pred_region
      %s12 = sadd.s32 0, 0
      %s13 = smul.u32 2, %s12
      %s15 = ssub.s32 256, 256
      %16 = vsyncadd [#allocation3], %s15
      %s17 = smul.addr %s13, 128
      %s18 = scalar_lea.hbm %s0, %s17
      %s19 = sshll.u32 [#allocation2], 4
      %s20 = int_to_ptr.vmem [resolvable:$true] %s19
      %25 = dma.hbm_to_vmem [thread:$0]  %s18, 256, %s20, [#allocation3], 128, 128, 8
    $region5: #{tpu_custom_call.1} parent=1 // pred_fallthru
      _
    // Predicated region
    $region6: #{tpu_custom_call.1} parent=1 // pred_check
      _
    $region7: #{tpu_custom_call.1} parent=1 // pred_check_branch
      %27 = sbr.rel (0) target = $region9
    $region8: #{tpu_custom_call.1} parent=1 // pred_region
      %s28 = sadd.s32 0, 0
      %s29 = smul.u32 2, %s28
      %s31 = ssub.s32 256, 256
      %32 = vsyncadd [#allocation6], %s31
      %s33 = smul.addr %s29, 128
      %s34 = scalar_lea.hbm %s1, %s33
      %s35 = sshll.u32 [#allocation5], 4
      %s36 = int_to_ptr.vmem [resolvable:$true] %s35
      %41 = dma.hbm_to_vmem [thread:$0]  %s34, 256, %s36, [#allocation6], 128, 128, 8
    $region9: #{tpu_custom_call.1} parent=1 // pred_fallthru
      _
    // Predicated region
    $region10: #{tpu_custom_call.1} parent=1 // pred_check
      _
    $region11: #{tpu_custom_call.1} parent=1 // pred_check_branch
      %43 = sbr.rel (0) target = $region13
    $region12: #{tpu_custom_call.1} parent=1 // pred_region
      %44 = dma.done [#allocation3], 256
    $region13: #{tpu_custom_call.1} parent=1 // pred_fallthru
      _
    // Predicated region
    $region14: #{tpu_custom_call.1} parent=1 // pred_check
      _
    $region15: #{tpu_custom_call.1} parent=1 // pred_check_branch
      %46 = sbr.rel (0) target = $region17
    $region16: #{tpu_custom_call.1} parent=1 // pred_region
      %47 = dma.done [#allocation6], 256
    $region17: #{tpu_custom_call.1} parent=1 // pred_fallthru
      _
    %s48 = sadd.s32 0, 0
    %s49 = smul.u32 2, %s48
    %s50 = sadd.s32 0, 0
    %s51 = smul.u32 2, %s50
    %p52 = scmp.eq.s32.totalorder 0, 0
    // Predicated region
    $region18: #{tpu_custom_call.1} parent=1 // pred_check
      %p53 = pneg %p52
    $region19: #{tpu_custom_call.1} parent=1 // pred_check_branch
      %55 = sbr.rel (%p53) target = $region21
    $region20: #{tpu_custom_call.1} parent=1 // pred_region
      %56 = vst [vmem:[#allocation7] sm:$0xff] 0.0
      %57 = vst [vmem:[#allocation7 + $0x8] sm:$0xff] 0.0
    $region21: #{tpu_custom_call.1} parent=1 // pred_fallthru
      _
    %v58 = vld [vmem:[#allocation2] sm:$0xff]
    %v59 = vld [vmem:[#allocation2 + $0x8] sm:$0xff]
    %v60 = vld [vmem:[#allocation5] sm:$0xff]
    %v61 = vld [vmem:[#allocation5 + $0x8] sm:$0xff]
    %v62 = vsub.f32 %v58, %v60
    %v63 = vsub.f32 %v59, %v61
    %v64 = vmul.f32 %v62, %v62
    %v65 = vmul.f32 %v63, %v63
    %v66 = vld [vmem:[#allocation7] sm:$0xff]
    %v67 = vld [vmem:[#allocation7 + $0x8] sm:$0xff]
    %v68 = vadd.f32 %v66, %v64
    %v69 = vadd.f32 %v67, %v65
    %70 = vst [vmem:[#allocation7] sm:$0xff] %v68
    %71 = vst [vmem:[#allocation7 + $0x8] sm:$0xff] %v69
    // Predicated region
    $region22: #{tpu_custom_call.1} parent=1 // pred_check
      _
    $region23: #{tpu_custom_call.1} parent=1 // pred_check_branch
      %73 = sbr.rel (0) target = $region25
    $region24: #{tpu_custom_call.1} parent=1 // pred_region
      %s75 = ssub.s32 256, 256
      %76 = vsyncadd [#allocation4], %s75
      %s77 = sshll.u32 [#allocation7], 4
      %s78 = int_to_ptr.vmem [resolvable:$true] %s77
      %83 = dma.vmem_to_hbm [thread:$0]  %s78, 256, %s2, [#allocation4], 128, 128, 8
    $region25: #{tpu_custom_call.1} parent=1 // pred_fallthru
      _
    // Predicated region
    $region26: #{tpu_custom_call.1} parent=1 // pred_check
      _
    $region27: #{tpu_custom_call.1} parent=1 // pred_check_branch
      %85 = sbr.rel (0) target = $region29
    $region28: #{tpu_custom_call.1} parent=1 // pred_region
      %86 = dma.done [#allocation4], 256
    $region29: #{tpu_custom_call.1} parent=1 // pred_fallthru
      _
    %87 = vsyncpa [#allocation3], 1
    %88 = vsyncpa [#allocation6], 1
    %89 = vsyncpa [#allocation4], 1

</llo_original>
